<compile_context>
chip_gen: v6e
topology: v6e:2x2x1
jax: 0.10.0
libtpu: 0.0.40
codegen_flags: <defaults>
</compile_context>

<pallas_src>
import functools

import jax
import jax.numpy as jnp
from jax import lax
from jax.experimental import pallas as pl
from jax.experimental.pallas import tpu as pltpu

_LANES = 128                     # lane width of the 2D streaming view
_BLOCK_ROWS = 4096               # 4096 * 128 * 4B = 2 MiB f32 tiles (8 * 2**9)
_SMALL_BYTES = 2 * 1024 * 1024   # single-shot path for inputs up to 2 MiB


def _rowmax_to8(x):
    """(R, L) f32 -> (8, L) max; R must be 8 * 2**k. Log-depth tree of vmaxes."""
    m = x
    while m.shape[0] > 8:
        h = m.shape[0] // 2
        m = jnp.maximum(m[:h], m[h:])
    return m


# ---------------- small-input fast path: one launch, whole array in VMEM ----
def _normalize_small_kernel(x_ref, o_ref):
    x = x_ref[...].astype(jnp.float32)
    peak = jnp.max(jnp.abs(x))
    # NOTE: all-zero input gives inf/nan, exactly like the PyTorch reference.
    o_ref[...] = (x * (1.0 / peak)).astype(o_ref.dtype)


def _normalize_small(waveform):
    return pl.pallas_call(
        _normalize_small_kernel,
        out_shape=jax.ShapeDtypeStruct(waveform.shape, waveform.dtype),
    )(waveform)


# ---------------- large-input path: two HBM-streaming passes ----------------
def _max_abs_kernel(x_ref, peak_ref, *, tail_rows):
    # x_ref: (_BLOCK_ROWS, _LANES) tile (last grid block may be partial).
    # peak_ref: (8, _LANES) f32 resident output accumulator.
    i = pl.program_id(0)
    nb = pl.num_programs(0)

    @pl.when(i == 0)
    def _():
        peak_ref[...] = jnp.zeros_like(peak_ref)   # |x| >= 0, so 0 is identity

    xa = jnp.abs(x_ref[...].astype(jnp.float32))

    if tail_rows:  # static: last block is partial -> mask its undefined rows
        @pl.when(i == nb - 1)
        def _():
            row = lax.broadcasted_iota(jnp.int32, xa.shape, 0)
            xm = jnp.where(row < tail_rows, xa, 0.0)
            peak_ref[...] = jnp.maximum(peak_ref[...], _rowmax_to8(xm))

        @pl.when(i != nb - 1)
        def _():
            peak_ref[...] = jnp.maximum(peak_ref[...], _rowmax_to8(xa))
    else:
        peak_ref[...] = jnp.maximum(peak_ref[...], _rowmax_to8(xa))


def _scale_kernel(peak_ref, x_ref, o_ref):
    # peak_ref: (8, _LANES) resident partial-max block; x_ref/o_ref: data tiles.
    # One XLU reduce + one exact scalar divide per tile, hidden under DMA.
    inv = 1.0 / jnp.max(peak_ref[...])
    o_ref[...] = (x_ref[...].astype(jnp.float32) * inv).astype(o_ref.dtype)


@jax.jit
def normalize_waveform(waveform):
    """Pallas equivalent of NormalizeLayer.forward: waveform / max(|waveform|)."""
    orig_shape = waveform.shape
    orig_dtype = waveform.dtype
    n = waveform.size

    # Small inputs: single launch, one read + one write, no intermediates.
    if n * waveform.dtype.itemsize <= _SMALL_BYTES or n < _BLOCK_ROWS * _LANES:
        return _normalize_small(waveform)

    x = waveform.reshape(-1)                    # contiguous flatten: free
    if n % _LANES == 0:
        rows = n // _LANES
        x2 = x.reshape(rows, _LANES)            # free reshape, no HBM copy
        padded = False
    else:
        # TODO(synk): lane-ragged lengths (n % 128 != 0) still pay a pad+slice
        # HBM round trip; handle the lane tail in-kernel to go fully zero-copy.
        rows = -(-n // _LANES)
        x2 = jnp.pad(x, (0, rows * _LANES - n)).reshape(rows, _LANES)
        padded = True

    num_blocks = -(-rows // _BLOCK_ROWS)
    tail_rows = rows % _BLOCK_ROWS              # 0 -> every block is full

    # Pass 1: running (8, _LANES) max of |x| over pipelined 2 MiB tiles.
    partial = pl.pallas_call(
        functools.partial(_max_abs_kernel, tail_rows=tail_rows),
        out_shape=jax.ShapeDtypeStruct((8, _LANES), jnp.float32),
        grid=(num_blocks,),
        in_specs=[pl.BlockSpec((_BLOCK_ROWS, _LANES), lambda i: (i, 0))],
        out_specs=pl.BlockSpec((8, _LANES), lambda i: (0, 0)),
        compiler_params=pltpu.CompilerParams(
            dimension_semantics=("arbitrary",)),
    )(x2)

    # Pass 2: y = x * (1/peak); tiles pipelined and split across TensorCores.
    # OOB rows of a partial last block are never written back, so no masking.
    y2 = pl.pallas_call(
        _scale_kernel,
        out_shape=jax.ShapeDtypeStruct((rows, _LANES), orig_dtype),
        grid=(num_blocks,),
        in_specs=[
            pl.BlockSpec((8, _LANES), lambda i: (0, 0)),            # resident
            pl.BlockSpec((_BLOCK_ROWS, _LANES), lambda i: (i, 0)),
        ],
        out_specs=pl.BlockSpec((_BLOCK_ROWS, _LANES), lambda i: (i, 0)),
        compiler_params=pltpu.CompilerParams(
            dimension_semantics=("parallel",)),
    )(partial, x2)

    y = y2.reshape(-1)
    if padded:
        y = y[:n]
    return y.reshape(orig_shape)


if __name__ == "__main__":
    key = jax.random.PRNGKey(0)

    # Small audio-like input (2 channels x 3000 samples) -> single-shot path.
    w_small = 3.0 * jax.random.normal(key, (2, 3000), dtype=jnp.float32)
    out_small = jax.block_until_ready(normalize_waveform(w_small))
    ref_small = w_small / jnp.max(jnp.abs(w_small))
    assert out_small.shape == w_small.shape
    assert jnp.allclose(out_small, ref_small, atol=1e-6, rtol=1e-5), float(
        jnp.max(jnp.abs(out_small - ref_small)))
    assert jnp.allclose(jnp.max(jnp.abs(out_small)), 1.0, atol=1e-6)

    # Modest input (~2 MiB) that exercises the streaming path: 2 grid blocks
    # with a ragged (1-row) last block, zero-copy wrapper (n % 128 == 0).
    w_big = 0.5 * jax.random.normal(jax.random.PRNGKey(1), (2, 262208),
                                    dtype=jnp.float32)
    out_big = jax.block_until_ready(normalize_waveform(w_big))
    ref_big = w_big / jnp.max(jnp.abs(w_big))
    assert out_big.shape == w_big.shape
    assert jnp.allclose(out_big, ref_big, atol=1e-6, rtol=1e-5), float(
        jnp.max(jnp.abs(out_big - ref_big)))

    print("KERNEL_OK")
</pallas_src>

<mosaic_0001>
module attributes {stable_mosaic.version = 11 : i64} {
  func.func @_normalize_small_kernel(%arg0: memref<2x3000xf32, #tpu.memory_space<vmem>>, %arg1: memref<2x3000xf32, #tpu.memory_space<vmem>>) attributes {dimension_semantics = [], scalar_prefetch = 0 : i64, scratch_operands = 0 : i64, tpu.core_type = #tpu.core_type<tc>} {
    %c0 = arith.constant 0 : index
    %c0_0 = arith.constant 0 : index
    %0 = vector.load %arg0[%c0, %c0_0] : memref<2x3000xf32, #tpu.memory_space<vmem>>, vector<2x3000xf32>
    %1 = math.absf %0 : vector<2x3000xf32>
    %2 = vector.shape_cast %1 : vector<2x3000xf32> to vector<1x2x3000xf32>
    %cst = arith.constant dense<0xFF800000> : vector<1xf32>
    %3 = vector.multi_reduction <maximumf>, %2, %cst [1, 2] : vector<1x2x3000xf32> to vector<1xf32>
    %4 = vector.shape_cast %3 : vector<1xf32> to vector<1x1x1xf32>
    %5 = vector.extract %4[0, 0, 0] : f32 from vector<1x1x1xf32>
    %cst_1 = arith.constant 1.000000e+00 : f32
    %6 = arith.divf %cst_1, %5 : f32
    %7 = vector.broadcast %6 : f32 to vector<2x3000xf32>
    %8 = arith.mulf %0, %7 : vector<2x3000xf32>
    %c0_2 = arith.constant 0 : index
    %c0_3 = arith.constant 0 : index
    %9 = vector.load %arg1[%c0_2, %c0_3] : memref<2x3000xf32, #tpu.memory_space<vmem>>, vector<2x3000xf32>
    tpu.vector_store %arg1[%c0_2, %c0_3], %8 {strides = array<i32>} : memref<2x3000xf32, #tpu.memory_space<vmem>>, vector<2x3000xf32>,
    return
  }
}

</mosaic_0001>

<llo_original>
// kernel: normalize_waveform.1
$region0: #{normalize_waveform.1}
  #allocation0 [shape = 'u32[]', space=smem, size = 0x4, offset = 0x4, fixed_abs, tag = 'smem constant byte address 0x4 - core index']
  #allocation1 [shape = 'u32[144,128]{1,0:T(1,128)}', space=vmem, size = 0x12000, scoped, tag = 'internal scratch']
  %s0 = inlined_call_operand.hbm [shape: f32[2,3000], index: 0, kind: input, shape index: {}]
  %s1 = inlined_call_operand.hbm [shape: f32[2,3000], index: 1, kind: output, shape index: {}]
  %s2 = sld [smem:[#allocation0]]
  $region18: #{normalize_waveform.1} parent=0
    _
  %s4 = ssub.s32 1, %s2
  %s5 = scalar_select 0, %s4, %s2
  $region1: #{normalize_waveform.1} parent=0
    #allocation2 [shape = 'u8[24576]{0}', space=vmem, size = 0x6000, scoped, tag = 'input window, operand 0, single buffered']
    #allocation3 [shape = 's32[1]{0}', space=sflag, size = 0x4, scoped, tag = 'scoped memory for normalize_waveform.1']
    #allocation4 [shape = 's32[1]{0}', space=sflag, size = 0x4, scoped, tag = 'scoped memory for normalize_waveform.1']
    #allocation5 [shape = 'u8[24576]{0}', space=vmem, size = 0x6000, scoped, tag = 'output window, operand 0, single buffered']
    %6 = vsyncpa [#allocation3], 0
    %7 = vsyncpa [#allocation4], 0
    // Predicated region
    $region2: #{normalize_waveform.1} parent=1 // pred_check
      _
    $region3: #{normalize_waveform.1} parent=1 // pred_check_branch
      %9 = sbr.rel (0) target = $region5
    $region4: #{normalize_waveform.1} parent=1 // pred_region
      %s11 = ssub.s32 768, 768
      %12 = vsyncadd [#allocation3], %s11
      %s14 = sshll.u32 [#allocation2], 4
      %s15 = int_to_ptr.vmem [resolvable:$true] %s14
      %17 = dma.hbm_to_vmem [thread:$0]  %s0, 768, %s15, [#allocation3]
    $region5: #{normalize_waveform.1} parent=1 // pred_fallthru
      _
    // Predicated region
    $region6: #{normalize_waveform.1} parent=1 // pred_check
      _
    $region7: #{normalize_waveform.1} parent=1 // pred_check_branch
      %19 = sbr.rel (0) target = $region9
    $region8: #{normalize_waveform.1} parent=1 // pred_region
      %20 = dma.done [#allocation3], 768
    $region9: #{normalize_waveform.1} parent=1 // pred_fallthru
      _
    %v21 = vld [vmem:[#allocation2] sm:$0xff]
    %v22 = vld [vmem:[#allocation2 + $0x8] sm:$0xff]
    %v23 = vld [vmem:[#allocation2 + $0x10] sm:$0xff]
    %v24 = vld [vmem:[#allocation2 + $0x18] sm:$0xff]
    %v25 = vld [vmem:[#allocation2 + $0x20] sm:$0xff]
    %v26 = vld [vmem:[#allocation2 + $0x28] sm:$0xff]
    %v27 = vand.u32 2147483647, %v21
    %v28 = vand.u32 2147483647, %v22
    %v29 = vand.u32 2147483647, %v23
    %v30 = vand.u32 2147483647, %v24
    %v31 = vand.u32 2147483647, %v25
    %v32 = vand.u32 2147483647, %v26
    %v39 = vcombine.high %v27, %v27
    %v41 = vunpack.c.l.s4 1983009808
    %v42 = vunpack.c.0.s8 %v41
    %v43 = vlaneseq
    %v44 = vshrl.u32 %v43, 7
    %v45 = vsub.s32 %v42, %v44
    %v46 = vrot.slane %v27, %v45
    %v48 = vunpack.c.l.s4 1983009808
    %v49 = vunpack.c.0.s8 %v48
    %v50 = vlaneseq
    %v51 = vshrl.u32 %v50, 7
    %v52 = vsub.s32 %v49, %v51
    %v53 = vrot.slane %v39, %v52
    %v54 = vcombine.high %v46, %v46
    %v55 = vcombine.high %v53, %v53
    %v56 = vcombine.high %v28, %v28
    %v58 = vunpack.c.l.s4 1983009808
    %v59 = vunpack.c.0.s8 %v58
    %v60 = vlaneseq
    %v61 = vshrl.u32 %v60, 7
    %v62 = vsub.s32 %v59, %v61
    %v63 = vrot.slane %v28, %v62
    %v65 = vunpack.c.l.s4 1983009808
    %v66 = vunpack.c.0.s8 %v65
    %v67 = vlaneseq
    %v68 = vshrl.u32 %v67, 7
    %v69 = vsub.s32 %v66, %v68
    %v70 = vrot.slane %v56, %v69
    %v71 = vcombine.high %v63, %v63
    %v72 = vcombine.high %v70, %v70
    %v73 = vcombine.high %v29, %v29
    %v75 = vunpack.c.l.s4 1983009808
    %v76 = vunpack.c.0.s8 %v75
    %v77 = vlaneseq
    %v78 = vshrl.u32 %v77, 7
    %v79 = vsub.s32 %v76, %v78
    %v80 = vrot.slane %v29, %v79
    %v82 = vunpack.c.l.s4 1983009808
    %v83 = vunpack.c.0.s8 %v82
    %v84 = vlaneseq
    %v85 = vshrl.u32 %v84, 7
    %v86 = vsub.s32 %v83, %v85
    %v87 = vrot.slane %v73, %v86
    %v88 = vcombine.high %v80, %v80
    %v89 = vcombine.high %v87, %v87
    %v90 = vcombine.high %v30, %v30
    %v92 = vunpack.c.l.s4 1983009808
    %v93 = vunpack.c.0.s8 %v92
    %v94 = vlaneseq
    %v95 = vshrl.u32 %v94, 7
    %v96 = vsub.s32 %v93, %v95
    %v97 = vrot.slane %v30, %v96
    %v99 = vunpack.c.l.s4 1983009808
    %v100 = vunpack.c.0.s8 %v99
    %v101 = vlaneseq
    %v102 = vshrl.u32 %v101, 7
    %v103 = vsub.s32 %v100, %v102
    %v104 = vrot.slane %v90, %v103
    %v105 = vcombine.high %v97, %v97
    %v106 = vcombine.high %v104, %v104
    %v107 = vcombine.high %v31, %v31
    %v109 = vunpack.c.l.s4 1983009808
    %v110 = vunpack.c.0.s8 %v109
    %v111 = vlaneseq
    %v112 = vshrl.u32 %v111, 7
    %v113 = vsub.s32 %v110, %v112
    %v114 = vrot.slane %v31, %v113
    %v116 = vunpack.c.l.s4 1983009808
    %v117 = vunpack.c.0.s8 %v116
    %v118 = vlaneseq
    %v119 = vshrl.u32 %v118, 7
    %v120 = vsub.s32 %v117, %v119
    %v121 = vrot.slane %v107, %v120
    %v122 = vcombine.high %v114, %v114
    %v123 = vcombine.high %v121, %v121
    %v124 = vcombine.high %v32, %v32
    %v126 = vunpack.c.l.s4 1983009808
    %v127 = vunpack.c.0.s8 %v126
    %v128 = vlaneseq
    %v129 = vshrl.u32 %v128, 7
    %v130 = vsub.s32 %v127, %v129
    %v131 = vrot.slane %v32, %v130
    %v133 = vunpack.c.l.s4 1983009808
    %v134 = vunpack.c.0.s8 %v133
    %v135 = vlaneseq
    %v136 = vshrl.u32 %v135, 7
    %v137 = vsub.s32 %v134, %v136
    %v138 = vrot.slane %v124, %v137
    %v139 = vcombine.high %v131, %v131
    %v140 = vcombine.high %v138, %v138
    %vm165 = vcmask 1041408
    %v166 = vsel %vm165, %v46, -inf
    %v167 = vsel %vm165, %v54, -inf
    %v168 = vsel %vm165, %v53, -inf
    %v169 = vsel %vm165, %v55, -inf
    %v170 = vsel %vm165, %v63, -inf
    %v171 = vmax.f32 %v166, %v170
    %v172 = vsel %vm165, %v71, -inf
    %v173 = vmax.f32 %v167, %v172
    %v174 = vsel %vm165, %v70, -inf
    %v175 = vmax.f32 %v168, %v174
    %v176 = vsel %vm165, %v72, -inf
    %v177 = vmax.f32 %v169, %v176
    %v178 = vsel %vm165, %v80, -inf
    %v179 = vmax.f32 %v171, %v178
    %v180 = vsel %vm165, %v88, -inf
    %v181 = vmax.f32 %v173, %v180
    %v182 = vsel %vm165, %v87, -inf
    %v183 = vmax.f32 %v175, %v182
    %v184 = vsel %vm165, %v89, -inf
    %v185 = vmax.f32 %v177, %v184
    %v186 = vsel %vm165, %v97, -inf
    %v187 = vmax.f32 %v179, %v186
    %v188 = vsel %vm165, %v105, -inf
    %v189 = vmax.f32 %v181, %v188
    %v190 = vsel %vm165, %v104, -inf
    %v191 = vmax.f32 %v183, %v190
    %v192 = vsel %vm165, %v106, -inf
    %v193 = vmax.f32 %v185, %v192
    %v194 = vsel %vm165, %v114, -inf
    %v195 = vmax.f32 %v187, %v194
    %v196 = vsel %vm165, %v122, -inf
    %v197 = vmax.f32 %v189, %v196
    %v198 = vsel %vm165, %v121, -inf
    %v199 = vmax.f32 %v191, %v198
    %v200 = vsel %vm165, %v123, -inf
    %v201 = vmax.f32 %v193, %v200
    %v202 = vsel %vm165, %v131, -inf
    %v203 = vmax.f32 %v195, %v202
    %v204 = vsel %vm165, %v139, -inf
    %v205 = vmax.f32 %v197, %v204
    %v206 = vsel %vm165, %v138, -inf
    %v207 = vmax.f32 %v199, %v206
    %vm208 = vcmask 451584
    %v209 = vsel %vm208, %v140, -inf
    %v210 = vmax.f32 %v201, %v209
    %v211 = vmax.f32 %v203, %v205
    %v212 = vmax.f32 %v207, %v210
    %v213 = vmax.f32 %v211, %v212
    %214 = vmax.xlane.f32.xlu0 %v213
    %v215 = vpop.xlane.xlu0 %214
    %v216 = vrot.slane %v215, 4
    %v217 = vmax.f32 %v215, %v216
    %v218 = vrot.slane %v217, 2
    %v219 = vmax.f32 %v217, %v218
    %v220 = vrot.slane %v219, 1
    %v221 = vmax.f32 %v219, %v220
    %s222 = vtos %v221
    %v223 = vstv %s222
    %v224 = vrcp.pop %v223
    %s225 = vtos %v224
    %v226 = vstv %s225
    %v227 = vmul.f32 %v21, %v226
    %v228 = vmul.f32 %v22, %v226
    %v229 = vmul.f32 %v23, %v226
    %v230 = vmul.f32 %v24, %v226
    %v231 = vmul.f32 %v25, %v226
    %v232 = vmul.f32 %v26, %v226
    %233 = vst [vmem:[#allocation5] sm:$0xff] %v227
    %234 = vst [vmem:[#allocation5 + $0x8] sm:$0xff] %v228
    %235 = vst [vmem:[#allocation5 + $0x10] sm:$0xff] %v229
    %236 = vst [vmem:[#allocation5 + $0x18] sm:$0xff] %v230
    %237 = vst [vmem:[#allocation5 + $0x20] sm:$0xff] %v231
    %vm238 = vcmask 1043458
    %vm239 = vmor %vm238, %vm165
    %vm240 = vcmask 1045508
    %vm241 = vmor %vm240, %vm239
    %vm242 = vcmask 457734
    %vm243 = vmor %vm242, %vm241
    %244 = vst.msk [vmem:[#allocation5 + $0x28] sm:$0xff] %vm243, %v232
    // Predicated region
    $region10: #{normalize_waveform.1} parent=1 // pred_check
      _
    $region11: #{normalize_waveform.1} parent=1 // pred_check_branch
      %246 = sbr.rel (0) target = $region13
    $region12: #{normalize_waveform.1} parent=1 // pred_region
      %s248 = ssub.s32 768, 768
      %249 = vsyncadd [#allocation4], %s248
      %s251 = sshll.u32 [#allocation5], 4
      %s252 = int_to_ptr.vmem [resolvable:$true] %s251
      %254 = dma.vmem_to_hbm [thread:$0]  %s252, 768, %s1, [#allocation4]
    $region13: #{normalize_waveform.1} parent=1 // pred_fallthru
      _
    // Predicated region
    $region14: #{normalize_waveform.1} parent=1 // pred_check
      _
    $region15: #{normalize_waveform.1} parent=1 // pred_check_branch
      %256 = sbr.rel (0) target = $region17
    $region16: #{normalize_waveform.1} parent=1 // pred_region
      %257 = dma.done [#allocation4], 768
    $region17: #{normalize_waveform.1} parent=1 // pred_fallthru
      _
    %258 = vsyncpa [#allocation3], 1
    %259 = vsyncpa [#allocation4], 1

</llo_original>
